<compile_context>
chip_gen: v5e
topology: v5e:2x2
jax: 0.10.0
libtpu: 0.0.40
codegen_flags: <defaults>
</compile_context>

<pallas_src>
import math
import functools

import jax
import jax.numpy as jnp
from jax import lax
from jax.experimental import pallas as pl
from jax.experimental.pallas import tpu as pltpu


def _round_up(v, m):
    return -(-v // m) * m


def _arcmargin_kernel(flags_ref,                               # SMEM [num_tiles] int32 (scalar prefetch)
                      x_ref, w_ref, rinv_x_ref, rinv_w_ref, label_ref,   # VMEM inputs
                      o_ref,                                    # VMEM output
                      *, scale, cos_m, sin_m, th, mm,
                      easy_margin, ls_eps, out_features, block_n):
    j = pl.program_id(0)
    col_start = j * block_n

    x = x_ref[...]          # [B, D]   resident (compute dtype, e.g. bf16)
    w = w_ref[...]          # [TN, D]  streamed class tile of W (compute dtype)

    # NT feed: contract dim 1 of both operands -> [B, TN] f32 accumulation on the MXU.
    raw = lax.dot_general(x, w,
                          dimension_numbers=(((1,), (1,)), ((), ())),
                          preferred_element_type=jnp.float32)

    # Normalization after the matmul: two cheap broadcast multiplies with precomputed
    # inverse norms (no in-kernel square+reduce of x or of the W tile).
    cosine = raw * rinv_x_ref[...] * rinv_w_ref[...]            # [B, TN] f32

    label = label_ref[...]                                      # [B, 1] int32 resident
    class_ids = col_start + lax.broadcasted_iota(jnp.int32, cosine.shape, 1)
    is_label = class_ids == label                               # [B, TN] bool

    scale_f = jnp.float32(scale)

    def margin_delta():
        # cos(theta + margin) - cos(theta).  Clamp 1-cos^2 to >= 0: identical to the
        # PyTorch forward except where PyTorch would NaN from rounding.
        sine = jnp.sqrt(jnp.maximum(1.0 - cosine * cosine, 0.0))
        phi = cosine * jnp.float32(cos_m) - sine * jnp.float32(sin_m)
        if easy_margin:
            phi = jnp.where(cosine > 0.0, phi, cosine)
        else:
            phi = jnp.where(cosine > jnp.float32(th), phi, cosine - jnp.float32(mm))
        return phi - cosine

    if ls_eps > 0.0:
        # Label smoothing touches every column -> full-tile path, folded (no f32 one_hot).
        d = margin_delta()
        out = (cosine
               + jnp.float32(ls_eps / out_features) * d
               + jnp.float32(1.0 - ls_eps) * jnp.where(is_label, d, 0.0)) * scale_f
        o_ref[...] = out.astype(o_ref.dtype)
    else:
        flag = flags_ref[j]

        @pl.when(flag == 0)
        def _():
            # No label falls in this class tile: logits are just scale * cosine.
            o_ref[...] = (cosine * scale_f).astype(o_ref.dtype)

        @pl.when(flag != 0)
        def _():
            d = margin_delta()
            o_ref[...] = ((cosine + jnp.where(is_label, d, 0.0)) * scale_f).astype(o_ref.dtype)


def arc_margin_product(x, weight, label, *, scale=30.0, margin=0.5,
                       easy_margin=False, ls_eps=0.0, block_n=None,
                       compute_dtype=jnp.bfloat16, out_dtype=jnp.float32,
                       w_inv_norm=None):
    """ArcMarginProduct.forward(input, label) -> scaled logits [B, out_features].

    x: [B, D] float, weight: [C, D] float (same layout as the nn.Parameter), label: [B] int.
    compute_dtype: dtype fed to the MXU (bf16 default, matching @autocast(); f32 available).
    w_inv_norm: optional precomputed [1, C] f32 inverse class-center norms (weight reuse).
    """
    B, D = x.shape
    C, Dw = weight.shape
    assert D == Dw

    # ---- class tile size: lane-dense, >= 2 tiles (v7x: 2 TensorCores), VMEM-capped ----
    VMEM_CAP = 48 * 1024 * 1024           # headroom under v7x's 64 MiB physical VMEM
    c_item = jnp.dtype(compute_dtype).itemsize
    o_item = jnp.dtype(out_dtype).itemsize

    def vmem_bytes(bn):
        return (2 * bn * D * c_item        # W tile, double-buffered
                + 2 * B * bn * o_item      # output tile, double-buffered
                + 2 * B * D * c_item       # x (counted conservatively as double-buffered)
                + 2 * bn * 4               # rinv_w tile
                + 4 * B * 4                # rinv_x + label
                + (2 << 20))               # slack for compiler scratch

    if block_n is None:
        block_n = min(2048, _round_up(max(pl.cdiv(C, 2), 1), 128))
    block_n = max(1, int(block_n))
    if block_n < C:
        block_n = _round_up(block_n, 128)  # lane-dense tiles (multiple of 128)
    block_n = min(block_n, C)              # == C -> single full-extent tile is also legal

    while block_n > 128 and vmem_bytes(block_n) > VMEM_CAP:
        new_bn = max(128, (block_n // 2 // 128) * 128)
        if new_bn == block_n:
            break
        block_n = new_bn

    num_tiles = pl.cdiv(C, block_n)
    vmem_limit = int(min(max(vmem_bytes(block_n), 32 * 1024 * 1024), VMEM_CAP))

    # ---- margin constants ----
    cos_m = math.cos(margin)
    sin_m = math.sin(margin)
    th = math.cos(math.pi - margin)
    mm = math.sin(math.pi - margin) * margin

    # ---- wrapper-side precompute (one pass over x / W, fused by XLA with the casts) ----
    eps_sq = jnp.float32(1e-24)            # (F.normalize eps = 1e-12)^2
    x_f32 = x.astype(jnp.float32)
    rinv_x = lax.rsqrt(jnp.maximum(jnp.sum(x_f32 * x_f32, axis=1, keepdims=True), eps_sq))
    if w_inv_norm is None:
        w_f32 = weight.astype(jnp.float32)
        rinv_w = lax.rsqrt(jnp.maximum(jnp.sum(w_f32 * w_f32, axis=1), eps_sq)).reshape(1, C)
    else:
        rinv_w = w_inv_norm.reshape(1, C).astype(jnp.float32)

    x_c = x.astype(compute_dtype)
    w_c = weight.astype(compute_dtype)     # stays [C, D]; no transpose materialized
    label_i32 = label.astype(jnp.int32)
    label_2d = label_i32.reshape(B, 1)

    # Per-class-tile flag (SMEM scalar prefetch): does any label fall in tile j?
    tile_flags = jnp.zeros((num_tiles,), jnp.int32).at[label_i32 // block_n].max(
        jnp.ones((B,), jnp.int32))

    kernel = functools.partial(
        _arcmargin_kernel,
        scale=float(scale), cos_m=cos_m, sin_m=sin_m, th=th, mm=mm,
        easy_margin=bool(easy_margin), ls_eps=float(ls_eps),
        out_features=C, block_n=block_n,
    )

    grid_spec = pltpu.PrefetchScalarGridSpec(
        num_scalar_prefetch=1,
        grid=(num_tiles,),
        in_specs=[
            pl.BlockSpec((B, D), lambda j, flags: (0, 0)),            # x: resident
            pl.BlockSpec((block_n, D), lambda j, flags: (j, 0)),      # W [C,D]: streamed class tiles
            pl.BlockSpec((B, 1), lambda j, flags: (0, 0)),            # rinv_x: resident
            pl.BlockSpec((1, block_n), lambda j, flags: (0, j)),      # rinv_w: lane tile
            pl.BlockSpec((B, 1), lambda j, flags: (0, 0)),            # label: resident
        ],
        out_specs=pl.BlockSpec((B, block_n), lambda j, flags: (0, j)),
    )

    return pl.pallas_call(
        kernel,
        out_shape=jax.ShapeDtypeStruct((B, C), out_dtype),
        grid_spec=grid_spec,
        compiler_params=pltpu.CompilerParams(
            dimension_semantics=("parallel",),   # class tiles independent -> v7x 2 TCs
            vmem_limit_bytes=vmem_limit,
        ),
    )(tile_flags, x_c, w_c, rinv_x, rinv_w, label_2d)


def _xavier_uniform(key, out_features, in_features):
    # nn.init.xavier_uniform_ on a [out, in] matrix: U(-a, a), a = sqrt(6/(fan_in+fan_out))
    a = math.sqrt(6.0 / (in_features + out_features))
    return jax.random.uniform(key, (out_features, in_features),
                              dtype=jnp.float32, minval=-a, maxval=a)


def _reference(x, weight, label, scale=30.0, margin=0.5, easy_margin=False, ls_eps=0.0):
    """Pure-JAX f32 reference mirroring the PyTorch forward."""
    eps = 1e-12
    xn = x / jnp.maximum(jnp.linalg.norm(x, axis=1, keepdims=True), eps)
    wn = weight / jnp.maximum(jnp.linalg.norm(weight, axis=1, keepdims=True), eps)
    cosine = xn @ wn.T
    sine = jnp.sqrt(1.0 - cosine ** 2)
    cos_m, sin_m = math.cos(margin), math.sin(margin)
    th = math.cos(math.pi - margin)
    mm = math.sin(math.pi - margin) * margin
    phi = cosine * cos_m - sine * sin_m
    if easy_margin:
        phi = jnp.where(cosine > 0, phi, cosine)
    else:
        phi = jnp.where(cosine > th, phi, cosine - mm)
    one_hot = jax.nn.one_hot(label, weight.shape[0], dtype=jnp.float32)
    if ls_eps > 0:
        one_hot = (1 - ls_eps) * one_hot + ls_eps / weight.shape[0]
    return (one_hot * phi + (1.0 - one_hot) * cosine) * scale


if __name__ == "__main__":
    # Small, TPU-friendly shapes consistent with the module (embedding dim 128,
    # 512 class centers, batch 8); tiled so the multi-tile grid path is exercised.
    B, in_features, out_features = 8, 128, 512

    key = jax.random.PRNGKey(0)
    kx, kw, kl = jax.random.split(key, 3)

    x = jax.random.normal(kx, (B, in_features), dtype=jnp.float32)
    weight = _xavier_uniform(kw, out_features, in_features)
    label = jax.random.randint(kl, (B,), 0, out_features, dtype=jnp.int32)

    ref0 = _reference(x, weight, label, scale=30.0, margin=0.5,
                      easy_margin=False, ls_eps=0.0)
    ref1 = _reference(x, weight, label, scale=30.0, margin=0.5,
                      easy_margin=True, ls_eps=0.1)

    # 1) f32 MXU path (exact check): ls_eps == 0 fast path, 4 class tiles.
    out_f32 = arc_margin_product(x, weight, label, scale=30.0, margin=0.5,
                                 easy_margin=False, ls_eps=0.0, block_n=128,
                                 compute_dtype=jnp.float32)
    out_f32 = jax.block_until_ready(out_f32)
    assert out_f32.shape == (B, out_features) and out_f32.dtype == jnp.float32
    assert jnp.allclose(out_f32, ref0, atol=1e-4, rtol=1e-4), \
        float(jnp.max(jnp.abs(out_f32 - ref0)))

    # 2) Default bf16 MXU path (matches @autocast() semantics), default block_n
    #    (>= 2 class tiles). Looser tolerance due to bf16 operand rounding.
    out_bf16 = arc_margin_product(x, weight, label, scale=30.0, margin=0.5,
                                  easy_margin=False, ls_eps=0.0)
    out_bf16 = jax.block_until_ready(out_bf16)
    assert jnp.allclose(out_bf16, ref0, atol=1e-1, rtol=2e-2), \
        float(jnp.max(jnp.abs(out_bf16 - ref0)))

    # 3) Label smoothing + easy_margin (full-tile folded blend path), bf16.
    out_ls = arc_margin_product(x, weight, label, scale=30.0, margin=0.5,
                                easy_margin=True, ls_eps=0.1, block_n=256)
    out_ls = jax.block_until_ready(out_ls)
    assert jnp.allclose(out_ls, ref1, atol=1e-1, rtol=2e-2), \
        float(jnp.max(jnp.abs(out_ls - ref1)))

    print("KERNEL_OK")
</pallas_src>

<mosaic_0001>
module attributes {stable_mosaic.version = 11 : i64} {
  func.func @_arcmargin_kernel(%arg0: i32, %arg1: memref<4xi32, #tpu.memory_space<smem>>, %arg2: memref<8x128xf32, #tpu.memory_space<vmem>>, %arg3: memref<128x128xf32, #tpu.memory_space<vmem>>, %arg4: memref<8x1xf32, #tpu.memory_space<vmem>>, %arg5: memref<1x128xf32, #tpu.memory_space<vmem>>, %arg6: memref<8x1xi32, #tpu.memory_space<vmem>>, %arg7: memref<8x128xf32, #tpu.memory_space<vmem>>) attributes {dimension_semantics = [#tpu.dimension_semantics<parallel>], iteration_bounds = array<i64: 4>, scalar_prefetch = 1 : i64, scratch_operands = 0 : i64, tpu.core_type = #tpu.core_type<tc>, window_params = [{pipeline_mode = #tpu.pipeline_mode<synchronous>, transform_indices = @transform_0, window_bounds = array<i64: 8, 128>}, {transform_indices = @transform_1, window_bounds = array<i64: 128, 128>}, {pipeline_mode = #tpu.pipeline_mode<synchronous>, transform_indices = @transform_2, window_bounds = array<i64: 8, 1>}, {transform_indices = @transform_3, window_bounds = array<i64: 1, 128>}, {pipeline_mode = #tpu.pipeline_mode<synchronous>, transform_indices = @transform_4, window_bounds = array<i64: 8, 1>}, {transform_indices = @transform_5, window_bounds = array<i64: 8, 128>}]} {
    %c128_i32 = arith.constant 128 : i32
    %0 = arith.muli %arg0, %c128_i32 : i32
    %c0 = arith.constant 0 : index
    %c0_0 = arith.constant 0 : index
    %1 = vector.load %arg2[%c0, %c0_0] : memref<8x128xf32, #tpu.memory_space<vmem>>, vector<8x128xf32>
    %c0_1 = arith.constant 0 : index
    %c0_2 = arith.constant 0 : index
    %2 = vector.load %arg3[%c0_1, %c0_2] : memref<128x128xf32, #tpu.memory_space<vmem>>, vector<128x128xf32>
    %cst = arith.constant dense<0.000000e+00> : vector<8x128xf32>
    %3 = tpu.matmul %1, %2, %cst {dimension_numbers = #tpu.dot_dimension_numbers<[1], [1], [0], [0], [0, 0, 1, 0], [], []>} : vector<8x128xf32>, vector<128x128xf32>, vector<8x128xf32> -> vector<8x128xf32>
    %c0_3 = arith.constant 0 : index
    %c0_4 = arith.constant 0 : index
    %4 = vector.load %arg4[%c0_3, %c0_4] : memref<8x1xf32, #tpu.memory_space<vmem>>, vector<8x1xf32>
    %5 = vector.broadcast %4 : vector<8x1xf32> to vector<8x128xf32>
    %6 = arith.mulf %3, %5 : vector<8x128xf32>
    %c0_5 = arith.constant 0 : index
    %c0_6 = arith.constant 0 : index
    %7 = vector.load %arg5[%c0_5, %c0_6] : memref<1x128xf32, #tpu.memory_space<vmem>>, vector<1x128xf32>
    %8 = vector.broadcast %7 : vector<1x128xf32> to vector<8x128xf32>
    %9 = arith.mulf %6, %8 : vector<8x128xf32>
    %c0_7 = arith.constant 0 : index
    %c0_8 = arith.constant 0 : index
    %10 = vector.load %arg6[%c0_7, %c0_8] : memref<8x1xi32, #tpu.memory_space<vmem>>, vector<8x1xi32>
    %11 = tpu.iota {dimensions = array<i32: 1>} : vector<8x128xi32>
    %12 = vector.broadcast %0 : i32 to vector<8x128xi32>
    %13 = arith.addi %12, %11 : vector<8x128xi32>
    %14 = vector.broadcast %10 : vector<8x1xi32> to vector<8x128xi32>
    %15 = arith.cmpi eq, %13, %14 : vector<8x128xi32>
    %16 = arith.index_cast %arg0 : i32 to index
    %17 = memref.load %arg1[%16] : memref<4xi32, #tpu.memory_space<smem>>
    %c0_i32 = arith.constant 0 : i32
    %18 = arith.cmpi eq, %17, %c0_i32 : i32
    %19 = arith.extui %18 : i1 to i32
    %cst_9 = arith.constant 3.000000e+01 : f32
    %c0_i32_10 = arith.constant 0 : i32
    %20 = arith.cmpi ne, %19, %c0_i32_10 : i32
    scf.if %20 {
      %24 = vector.broadcast %cst_9 : f32 to vector<8x128xf32>
      %25 = arith.mulf %9, %24 : vector<8x128xf32>
      %c0_14 = arith.constant 0 : index
      %c0_15 = arith.constant 0 : index
      %26 = vector.load %arg7[%c0_14, %c0_15] : memref<8x128xf32, #tpu.memory_space<vmem>>, vector<8x128xf32>
      tpu.vector_store %arg7[%c0_14, %c0_15], %25 {strides = array<i32>} : memref<8x128xf32, #tpu.memory_space<vmem>>, vector<8x128xf32>,
    } else {
    }
    %c0_i32_11 = arith.constant 0 : i32
    %21 = arith.cmpi ne, %17, %c0_i32_11 : i32
    %22 = arith.extui %21 : i1 to i32
    %cst_12 = arith.constant 3.000000e+01 : f32
    %c0_i32_13 = arith.constant 0 : i32
    %23 = arith.cmpi ne, %22, %c0_i32_13 : i32
    scf.if %23 {
      %24 = arith.mulf %9, %9 : vector<8x128xf32>
      %cst_14 = arith.constant 1.000000e+00 : f32
      %25 = vector.broadcast %cst_14 : f32 to vector<8x128xf32>
      %26 = arith.subf %25, %24 : vector<8x128xf32>
      %cst_15 = arith.constant 0.000000e+00 : f32
      %27 = vector.broadcast %cst_15 : f32 to vector<8x128xf32>
      %28 = arith.maximumf %26, %27 : vector<8x128xf32>
      %29 = math.sqrt %28 : vector<8x128xf32>
      %cst_16 = arith.constant 0.87758255 : f32
      %30 = vector.broadcast %cst_16 : f32 to vector<8x128xf32>
      %31 = arith.mulf %9, %30 : vector<8x128xf32>
      %cst_17 = arith.constant 0.47942555 : f32
      %32 = vector.broadcast %cst_17 : f32 to vector<8x128xf32>
      %33 = arith.mulf %29, %32 : vector<8x128xf32>
      %34 = arith.subf %31, %33 : vector<8x128xf32>
      %cst_18 = arith.constant -0.87758255 : f32
      %35 = vector.broadcast %cst_18 : f32 to vector<8x128xf32>
      %36 = arith.cmpf ogt, %9, %35 : vector<8x128xf32>
      %cst_19 = arith.constant 0.239712775 : f32
      %37 = vector.broadcast %cst_19 : f32 to vector<8x128xf32>
      %38 = arith.subf %9, %37 : vector<8x128xf32>
      %39 = arith.select %36, %34, %38 : vector<8x128xi1>, vector<8x128xf32>
      %40 = arith.subf %39, %9 : vector<8x128xf32>
      %cst_20 = arith.constant 0.000000e+00 : f32
      %41 = vector.broadcast %cst_20 : f32 to vector<8x128xf32>
      %42 = arith.select %15, %40, %41 : vector<8x128xi1>, vector<8x128xf32>
      %43 = arith.addf %9, %42 : vector<8x128xf32>
      %44 = vector.broadcast %cst_12 : f32 to vector<8x128xf32>
      %45 = arith.mulf %43, %44 : vector<8x128xf32>
      %c0_21 = arith.constant 0 : index
      %c0_22 = arith.constant 0 : index
      %46 = vector.load %arg7[%c0_21, %c0_22] : memref<8x128xf32, #tpu.memory_space<vmem>>, vector<8x128xf32>
      tpu.vector_store %arg7[%c0_21, %c0_22], %45 {strides = array<i32>} : memref<8x128xf32, #tpu.memory_space<vmem>>, vector<8x128xf32>,
    } else {
    }
    return
  }
  func.func @transform_0(%arg0: i32, %arg1: memref<4xi32, #tpu.memory_space<smem>>) -> (i32, i32) {
    %c0_i32 = arith.constant 0 : i32
    %c0_i32_0 = arith.constant 0 : i32
    %c0_i32_1 = arith.constant 0 : i32
    return %c0_i32, %c0_i32_0 : i32, i32
  }
  func.func @transform_1(%arg0: i32, %arg1: memref<4xi32, #tpu.memory_space<smem>>) -> (i32, i32) {
    %c0_i32 = arith.constant 0 : i32
    %c0_i32_0 = arith.constant 0 : i32
    return %arg0, %c0_i32 : i32, i32
  }
  func.func @transform_2(%arg0: i32, %arg1: memref<4xi32, #tpu.memory_space<smem>>) -> (i32, i32) {
    %c0_i32 = arith.constant 0 : i32
    %c0_i32_0 = arith.constant 0 : i32
    %c0_i32_1 = arith.constant 0 : i32
    return %c0_i32, %c0_i32_0 : i32, i32
  }
  func.func @transform_3(%arg0: i32, %arg1: memref<4xi32, #tpu.memory_space<smem>>) -> (i32, i32) {
    %c0_i32 = arith.constant 0 : i32
    %c0_i32_0 = arith.constant 0 : i32
    return %c0_i32, %arg0 : i32, i32
  }
  func.func @transform_4(%arg0: i32, %arg1: memref<4xi32, #tpu.memory_space<smem>>) -> (i32, i32) {
    %c0_i32 = arith.constant 0 : i32
    %c0_i32_0 = arith.constant 0 : i32
    %c0_i32_1 = arith.constant 0 : i32
    return %c0_i32, %c0_i32_0 : i32, i32
  }
  func.func @transform_5(%arg0: i32, %arg1: memref<4xi32, #tpu.memory_space<smem>>) -> (i32, i32) {
    %c0_i32 = arith.constant 0 : i32
    %c0_i32_0 = arith.constant 0 : i32
    return %c0_i32, %arg0 : i32, i32
  }
}

</mosaic_0001>

<llo_original>
// kernel: tpu_custom_call.1
$region0: #{tpu_custom_call.1}
  #allocation0 [shape = 'u32[]', space=smem, size = 0x4, offset = 0x4, fixed_abs, tag = 'smem constant byte address 0x4 - core index']
  #allocation1 [shape = 'u32[72,128]{1,0:T(1,128)}', space=vmem, size = 0x9000, scoped, tag = 'internal scratch']
  #allocation2 [shape = 's32[1]{0}', space=sflag, size = 0x4, scoped, tag = 'scoped memory for tpu_custom_call.1']
  #allocation3 [shape = 'u8[512]{0}', space=smem, size = 0x200, scoped, tag = 'prefetched SMEM operand 0']
  %s0 = inlined_call_operand.vmem [shape: s32[4], index: 0, kind: input, shape index: {}]
  %s1 = inlined_call_operand.vmem [shape: f32[8,128], index: 1, kind: input, shape index: {}]
  %s2 = inlined_call_operand.hbm [shape: f32[512,128], index: 2, kind: input, shape index: {}]
  %s3 = inlined_call_operand.vmem [shape: f32[8,1], index: 3, kind: input, shape index: {}]
  %s4 = inlined_call_operand.vmem [shape: f32[1,512], index: 4, kind: input, shape index: {}]
  %s5 = inlined_call_operand.vmem [shape: s32[8,1], index: 5, kind: input, shape index: {}]
  %s6 = inlined_call_operand.hbm [shape: f32[8,512], index: 6, kind: output, shape index: {}]
  %s7 = sld [smem:[#allocation0]]
  $region65: #{tpu_custom_call.1} parent=0
    _
  %s9 = ssub.s32 1, %s7
  %s10 = scalar_select 0, %s9, %s7
  %s12 = sshll.u32 %s0, 4
  %s13 = int_to_ptr.vmem [resolvable:$true] %s12
  %15 = dma.vmem_to_smem %s13, 16, [#allocation3], [#allocation2]
  %17 = dma.done [#allocation2], 16
  %18 = sfence
  $region1: #{tpu_custom_call.1} parent=0
    #allocation4 [shape = 'u8[131072]{0}', space=vmem, size = 0x20000, scoped, tag = 'input window, operand 2']
    #allocation5 [shape = 's32[2]{0}', space=sflag, size = 0x8, scoped, tag = 'scoped memory for tpu_custom_call.1']
    #allocation6 [shape = 's32[2]{0}', space=sflag, size = 0x8, scoped, tag = 'scoped memory for tpu_custom_call.1']
    #allocation7 [shape = 'u8[8192]{0}', space=vmem, size = 0x2000, scoped, tag = 'output window, operand 0']
    %19 = vsyncpa [#allocation5], 0
    %s20 = scalar_lea.sflag [#allocation5], 1
    %21 = vsyncpa %s20, 0
    %22 = vsyncpa [#allocation6], 0
    %s23 = scalar_lea.sflag [#allocation6], 1
    %24 = vsyncpa %s23, 0
    loop: start=0, step=1, limit=6
    $region2: #{tpu_custom_call.1} parent=1 // loop_pre_header
      _
    $region3: #{tpu_custom_call.1} parent=1 // loop_header
      %s26 = sphi 0, %s30
      %p27 = scmp.ge.s32.totalorder %s26, 6
      %s34 = sphi 0, %s34
      %s36 = sphi 0, %s34
      %s37 = sphi 0, %s36
      %s51 = sphi 0, %s37
      %s57 = sphi 0, %s59
      %s60 = sphi 0, %s57
      %s61 = sphi 0, %s60
      %s77 = sphi 0, %s61
      %s81 = sphi 0, %s81
      %s83 = sphi 0, %s81
      %s84 = sphi 0, %s83
      %s98 = sphi 0, %s84
      %s104 = sphi 0, %s106
      %s107 = sphi 0, %s104
      %s108 = sphi 0, %s107
      %s124 = sphi 0, %s108
      %s128 = sphi 0, %s128
      %s130 = sphi 0, %s128
      %s131 = sphi 0, %s130
      %s145 = sphi 0, %s131
      %s151 = sphi 0, %s153
      %s154 = sphi 0, %s151
      %s155 = sphi 0, %s154
      %s171 = sphi 0, %s155
    $region4: #{tpu_custom_call.1} parent=1 // loop_header_branch
      %29 = sbr.rel (%p27) target = $region8
    $region5: #{tpu_custom_call.1} parent=1 // loop_body
      %s31 = ssub.s32 %s26, 1
      %s32 = ssub.s32 %s26, 2
      %s33 = sadd.s32 %s26, 1
      %s35 = sadd.s32 %s34, 1
      %p38 = scmp.eq.s32.totalorder %s26, 3
      %p39 = scmp.ne.s32.totalorder %s34, %s36
      %p40 = scmp.eq.s32.totalorder %s26, 0
      %p41 = por %p39, %p40
      %p42 = scmp.ne.s32.totalorder %s34, %s36
      %p43 = scmp.eq.s32.totalorder %s31, 3
      %p44 = por %p42, %p43
      %p45 = scmp.ne.s32.totalorder %s36, %s37
      %p46 = scmp.eq.s32.totalorder %s31, 0
      %p47 = por %p45, %p46
      %p48 = scmp.ne.s32.totalorder %s36, %s37
      %p49 = scmp.eq.s32.totalorder %s32, 3
      %p50 = por %p48, %p49
      %p52 = scmp.ne.s32.totalorder %s37, %s51
      %p53 = scmp.eq.s32.totalorder %s32, 0
      %p54 = por %p52, %p53
      %s55 = ssub.s32 %s26, %s33
      %p56 = scmp.eq.s32.totalorder %s55, 0
      %s58 = sadd.s32 %s57, 1
      %s59 = scalar_select %p56, %s57, %s58
      %p62 = pneg %p56
      %p63 = scmp.eq.s32.totalorder %s26, 3
      %p64 = por %p62, %p63
      %p65 = scmp.ne.s32.totalorder %s57, %s60
      %p66 = scmp.eq.s32.totalorder %s26, 0
      %p67 = por %p65, %p66
      %p68 = scmp.ne.s32.totalorder %s57, %s60
      %p69 = scmp.eq.s32.totalorder %s31, 3
      %p70 = por %p68, %p69
      %p71 = scmp.ne.s32.totalorder %s60, %s61
      %p72 = scmp.eq.s32.totalorder %s31, 0
      %p73 = por %p71, %p72
      %p74 = scmp.ne.s32.totalorder %s60, %s61
      %p75 = scmp.eq.s32.totalorder %s32, 3
      %p76 = por %p74, %p75
      %p78 = scmp.ne.s32.totalorder %s61, %s77
      %p79 = scmp.eq.s32.totalorder %s32, 0
      %p80 = por %p78, %p79
      %s82 = sadd.s32 %s81, 1
      %p85 = scmp.eq.s32.totalorder %s26, 3
      %p86 = scmp.ne.s32.totalorder %s81, %s83
      %p87 = scmp.eq.s32.totalorder %s26, 0
      %p88 = por %p86, %p87
      %p89 = scmp.ne.s32.totalorder %s81, %s83
      %p90 = scmp.eq.s32.totalorder %s31, 3
      %p91 = por %p89, %p90
      %p92 = scmp.ne.s32.totalorder %s83, %s84
      %p93 = scmp.eq.s32.totalorder %s31, 0
      %p94 = por %p92, %p93
      %p95 = scmp.ne.s32.totalorder %s83, %s84
      %p96 = scmp.eq.s32.totalorder %s32, 3
      %p97 = por %p95, %p96
      %p99 = scmp.ne.s32.totalorder %s84, %s98
      %p100 = scmp.eq.s32.totalorder %s32, 0
      %p101 = por %p99, %p100
      %s102 = ssub.s32 %s26, %s33
      %p103 = scmp.eq.s32.totalorder %s102, 0
      %s105 = sadd.s32 %s104, 1
      %s106 = scalar_select %p103, %s104, %s105
      %p109 = pneg %p103
      %p110 = scmp.eq.s32.totalorder %s26, 3
      %p111 = por %p109, %p110
      %p112 = scmp.ne.s32.totalorder %s104, %s107
      %p113 = scmp.eq.s32.totalorder %s26, 0
      %p114 = por %p112, %p113
      %p115 = scmp.ne.s32.totalorder %s104, %s107
      %p116 = scmp.eq.s32.totalorder %s31, 3
      %p117 = por %p115, %p116
      %p118 = scmp.ne.s32.totalorder %s107, %s108
      %p119 = scmp.eq.s32.totalorder %s31, 0
      %p120 = por %p118, %p119
      %p121 = scmp.ne.s32.totalorder %s107, %s108
      %p122 = scmp.eq.s32.totalorder %s32, 3
      %p123 = por %p121, %p122
      %p125 = scmp.ne.s32.totalorder %s108, %s124
      %p126 = scmp.eq.s32.totalorder %s32, 0
      %p127 = por %p125, %p126
      %s129 = sadd.s32 %s128, 1
      %p132 = scmp.eq.s32.totalorder %s26, 3
      %p133 = scmp.ne.s32.totalorder %s128, %s130
      %p134 = scmp.eq.s32.totalorder %s26, 0
      %p135 = por %p133, %p134
      %p136 = scmp.ne.s32.totalorder %s128, %s130
      %p137 = scmp.eq.s32.totalorder %s31, 3
      %p138 = por %p136, %p137
      %p139 = scmp.ne.s32.totalorder %s130, %s131
      %p140 = scmp.eq.s32.totalorder %s31, 0
      %p141 = por %p139, %p140
      %p142 = scmp.ne.s32.totalorder %s130, %s131
      %p143 = scmp.eq.s32.totalorder %s32, 3
      %p144 = por %p142, %p143
      %p146 = scmp.ne.s32.totalorder %s131, %s145
      %p147 = scmp.eq.s32.totalorder %s32, 0
      %p148 = por %p146, %p147
      %s149 = ssub.s32 %s26, %s33
      %p150 = scmp.eq.s32.totalorder %s149, 0
      %s152 = sadd.s32 %s151, 1
      %s153 = scalar_select %p150, %s151, %s152
      %p156 = pneg %p150
      %p157 = scmp.eq.s32.totalorder %s26, 3
      %p158 = por %p156, %p157
      %p159 = scmp.ne.s32.totalorder %s151, %s154
      %p160 = scmp.eq.s32.totalorder %s26, 0
      %p161 = por %p159, %p160
      %p162 = scmp.ne.s32.totalorder %s151, %s154
      %p163 = scmp.eq.s32.totalorder %s31, 3
      %p164 = por %p162, %p163
      %p165 = scmp.ne.s32.totalorder %s154, %s155
      %p166 = scmp.eq.s32.totalorder %s31, 0
      %p167 = por %p165, %p166
      %p168 = scmp.ne.s32.totalorder %s154, %s155
      %p169 = scmp.eq.s32.totalorder %s32, 3
      %p170 = por %p168, %p169
      %p172 = scmp.ne.s32.totalorder %s155, %s171
      %p173 = scmp.eq.s32.totalorder %s32, 0
      %p174 = por %p172, %p173
      %p175 = scmp.le.s32.totalorder 1, %s26
      %p176 = scmp.lt.s32.totalorder %s26, 5
      %p177 = pnand %p175, %p176
      %p178 = pneg %p177
      // Predicated region
      $region9: #{tpu_custom_call.1} parent=5 // pred_check
        _
      $region10: #{tpu_custom_call.1} parent=5 // pred_check_branch
        %180 = sbr.rel (%p177) target = $region12
      $region11: #{tpu_custom_call.1} parent=5 // pred_region
        %s181 = ssub.s32 %s26, 1
        // Predicated region
        $region13: #{tpu_custom_call.1} parent=11 // pred_check
          %p182 = pneg %p47
        $region14: #{tpu_custom_call.1} parent=11 // pred_check_branch
          %184 = sbr.rel (%p182) target = $region16
        $region15: #{tpu_custom_call.1} parent=11 // pred_region
          _
        $region16: #{tpu_custom_call.1} parent=11 // pred_fallthru
          _
        // Predicated region
        $region17: #{tpu_custom_call.1} parent=11 // pred_check
          %p185 = pneg %p94
        $region18: #{tpu_custom_call.1} parent=11 // pred_check_branch
          %187 = sbr.rel (%p185) target = $region20
        $region19: #{tpu_custom_call.1} parent=11 // pred_region
          _
        $region20: #{tpu_custom_call.1} parent=11 // pred_fallthru
          _
        // Predicated region
        $region21: #{tpu_custom_call.1} parent=11 // pred_check
          %p188 = pneg %p141
        $region22: #{tpu_custom_call.1} parent=11 // pred_check_branch
          %190 = sbr.rel (%p188) target = $region24
        $region23: #{tpu_custom_call.1} parent=11 // pred_region
          _
        $region24: #{tpu_custom_call.1} parent=11 // pred_fallthru
          _
      $region12: #{tpu_custom_call.1} parent=5 // pred_fallthru
        _
      %p191 = scmp.lt.s32.totalorder %s26, 4
      // Predicated region
      $region25: #{tpu_custom_call.1} parent=5 // pred_check
        %p192 = pneg %p191
      $region26: #{tpu_custom_call.1} parent=5 // pred_check_branch
        %194 = sbr.rel (%p192) target = $region28
      $region27: #{tpu_custom_call.1} parent=5 // pred_region
        // Predicated region
        $region29: #{tpu_custom_call.1} parent=27 // pred_check
          %p195 = pneg %p67
        $region30: #{tpu_custom_call.1} parent=27 // pred_check_branch
          %197 = sbr.rel (%p195) target = $region32
        $region31: #{tpu_custom_call.1} parent=27 // pred_region
          %s198 = sand.u32 %s57, 1
          %s199 = scalar_lea.sflag [#allocation5], %s198
          %s200 = sand.u32 %s57, 1
          %s201 = smul.addr %s200, 128
          %s202 = scalar_lea.vmem [#allocation4], %s201
          %s203 = smul.u32 16, %s26
          %205 = vsyncadd %s199, 0
          %s206 = smul.addr %s203, 8
          %s207 = scalar_lea.hbm %s2, %s206
          %s208 = sshll.u32 %s207, 4
          %s209 = int_to_ptr.hbm [resolvable:$true] %s208
          %s210 = sshll.u32 %s202, 4
          %s211 = int_to_ptr.vmem [resolvable:$true] %s210
          %216 = dma.hbm_to_vmem [thread:$0]  %s209, 2048, %s211, %s199, 128, 128, 8
        $region32: #{tpu_custom_call.1} parent=27 // pred_fallthru
          _
        // Predicated region
        $region33: #{tpu_custom_call.1} parent=27 // pred_check
          %p217 = pneg %p114
        $region34: #{tpu_custom_call.1} parent=27 // pred_check_branch
          %219 = sbr.rel (%p217) target = $region36
        $region35: #{tpu_custom_call.1} parent=27 // pred_region
          %p220 = scmp.lt.s32.totalorder %s26, 3
          %s221 = scalar_select %p220, %s26, 3
          %s222 = scalar_lea.vmem %s4, %s221
        $region36: #{tpu_custom_call.1} parent=27 // pred_fallthru
          _
      $region28: #{tpu_custom_call.1} parent=5 // pred_fallthru
        _
      %p223 = scmp.le.s32.totalorder 1, %s26
      %p224 = scmp.lt.s32.totalorder %s26, 5
      %p225 = pnand %p223, %p224
      %p226 = pneg %p225
      // Predicated region
      $region37: #{tpu_custom_call.1} parent=5 // pred_check
        _
      $region38: #{tpu_custom_call.1} parent=5 // pred_check_branch
        %228 = sbr.rel (%p225) target = $region40
      $region39: #{tpu_custom_call.1} parent=5 // pred_region
        %s229 = ssub.s32 %s26, 1
        %s230 = sand.u32 %s60, 1
        %s231 = scalar_lea.sflag [#allocation5], %s230
        %s232 = sand.u32 %s60, 1
        %s233 = smul.addr %s232, 128
        %s234 = scalar_lea.vmem [#allocation4], %s233
        // Predicated region
        $region41: #{tpu_custom_call.1} parent=39 // pred_check
          %p235 = pneg %p73
        $region42: #{tpu_custom_call.1} parent=39 // pred_check_branch
          %237 = sbr.rel (%p235) target = $region44
        $region43: #{tpu_custom_call.1} parent=39 // pred_region
          %239 = dma.done %s231, 2048
        $region44: #{tpu_custom_call.1} parent=39 // pred_fallthru
          _
        %p240 = pneg %p47
        %p241 = pneg %p44
        %s242 = sand.u32 %s60, 1
        %s243 = scalar_lea.sflag [#allocation5], %s242
        %s244 = sand.u32 %s60, 1
        %s245 = smul.addr %s244, 128
        %s246 = scalar_lea.vmem [#allocation4], %s245
        %p247 = pneg %p73
        %p248 = pneg %p70
        %p249 = pneg %p94
        %p250 = pneg %p91
        %p251 = scmp.lt.s32.totalorder %s31, 3
        %s252 = scalar_select %p251, %s31, 3
        %s253 = scalar_lea.vmem %s4, %s252
        %p254 = pneg %p120
        %p255 = pneg %p117
        %p256 = pneg %p141
        %p257 = pneg %p138
        %p258 = pneg %p167
        %p259 = pneg %p164
        %s260 = sand.u32 %s154, 1
        %s261 = scalar_lea.sflag [#allocation6], %s260
        %s262 = sand.u32 %s154, 1
        %s263 = smul.addr %s262, 8
        %s264 = scalar_lea.vmem [#allocation7], %s263
        %s265 = smul.u32 16, %s31
        %p266 = scmp.lt.s32.totalorder %s31, 3
        %s267 = scalar_select %p266, %s31, 3
        %s268 = scalar_lea.vmem %s4, %s267
        %s269 = smul.u32 %s31, 128
        %v270 = vld [vmem:[%s1] sm:$0xff]
        %v271 = vld [vmem:[%s234] sm:$0xff]
        %v272 = vld [vmem:[%s234 + $0x8] sm:$0xff]
        %v273 = vld [vmem:[%s234 + $0x10] sm:$0xff]
        %v274 = vld [vmem:[%s234 + $0x18] sm:$0xff]
        %v275 = vld [vmem:[%s234 + $0x20] sm:$0xff]
        %v276 = vld [vmem:[%s234 + $0x28] sm:$0xff]
        %v277 = vld [vmem:[%s234 + $0x30] sm:$0xff]
        %v278 = vld [vmem:[%s234 + $0x38] sm:$0xff]
        %v279 = vld [vmem:[%s234 + $0x40] sm:$0xff]
        %v280 = vld [vmem:[%s234 + $0x48] sm:$0xff]
        %v281 = vld [vmem:[%s234 + $0x50] sm:$0xff]
        %v282 = vld [vmem:[%s234 + $0x58] sm:$0xff]
        %v283 = vld [vmem:[%s234 + $0x60] sm:$0xff]
        %v284 = vld [vmem:[%s234 + $0x68] sm:$0xff]
        %v285 = vld [vmem:[%s234 + $0x70] sm:$0xff]
        %v286 = vld [vmem:[%s234 + $0x78] sm:$0xff]
        %287 = vmatpush.xpose.msra.mxu0 %v286
        %288 = vmatpush.xpose.msra.mxu0 %v285
        %289 = vmatpush.xpose.msra.mxu0 %v284
        %290 = vmatpush.xpose.msra.mxu0 %v283
        %291 = vmatpush.xpose.msra.mxu0 %v282
        %292 = vmatpush.xpose.msra.mxu0 %v281
        %293 = vmatpush.xpose.msra.mxu0 %v280
        %294 = vmatpush.xpose.msra.mxu0 %v279
        %295 = vmatpush.xpose.msra.mxu0 %v278
        %296 = vmatpush.xpose.msra.mxu0 %v277
        %297 = vmatpush.xpose.msra.mxu0 %v276
        %298 = vmatpush.xpose.msra.mxu0 %v275
        %299 = vmatpush.xpose.msra.mxu0 %v274
        %300 = vmatpush.xpose.msra.mxu0 %v273
        %301 = vmatpush.xpose.msra.mxu0 %v272
        %302 = vmatpush.xpose.msra.mxu0 %v271
        %303 = vmatmul.f32.gmra.mxu0 %v270
        %v304 = vpop.f32.mrf.mxu0
        %v305 = vadd.f32 0.0, %v304
        %306 = vdwg.mxu0
        %v307 = vld [vmem:[%s3] sm:$0xff]
        %309 = vset.pattern.permute.xlu0 0
        %310 = vperm.xlu0 %309, %v307
        %v311 = vpop.permute.xlu0 %310
        %v313 = vmul.f32 %v305, %v311
        %v314 = vld [vmem:[%s268] sm:$0x1]
        %v316 = vperm.slane %v314, 0
        %v318 = vmul.f32 %v313, %v316
        %v319 = vld [vmem:[%s5] sm:$0xff]
        %v320 = vlaneseq
        %v321 = vand.u32 %v320, 127
        %v322 = vstv %s269
        %v323 = vadd.s32 %v322, %v321
        %324 = vset.pattern.permute.xlu0 0
        %325 = vperm.xlu0 %324, %v319
        %v326 = vpop.permute.xlu0 %325
        %vm327 = vcmp.eq.s32.totalorder %v323, %v326
        %s328 = sld [smem:[#allocation3 + %s31]]
        %p329 = scmp.eq.s32.totalorder %s328, 0
        // Predicated region
        $region45: #{tpu_custom_call.1} parent=39 // pred_check
          %p330 = pneg %p329
        $region46: #{tpu_custom_call.1} parent=39 // pred_check_branch
          %332 = sbr.rel (%p330) target = $region48
        $region47: #{tpu_custom_call.1} parent=39 // pred_region
          %v333 = vmul.f32 %v318, 30.0
          %334 = vst [vmem:[%s264] sm:$0xff] %v333
        $region48: #{tpu_custom_call.1} parent=39 // pred_fallthru
          _
        %p335 = scmp.ne.s32.totalorder %s328, 0
        // Predicated region
        $region49: #{tpu_custom_call.1} parent=39 // pred_check
          %p336 = pneg %p335
        $region50: #{tpu_custom_call.1} parent=39 // pred_check_branch
          %338 = sbr.rel (%p336) target = $region52
        $region51: #{tpu_custom_call.1} parent=39 // pred_region
          %v339 = vmul.f32 %v318, %v318
          %v340 = vsub.f32 1.0, %v339
          %v341 = vmax.f32 %v340, 0.0
          %v342 = vrsqrt.pop %v341
          %v343 = vmul.f32 %v342, %v341
          %v344 = vmul.f32 %v343, %v342
          %v345 = vmul.f32 0.5, %v344
          %v346 = vsub.f32 1.5, %v345
          %v347 = vmul.f32 %v342, %v346
          %v348 = vmul.f32 %v341, %v347
          %vm349 = vcmp.eq.f32.partialorder %v341, inf
          %v350 = vsel %vm349, %v341, %v348
          %vm351 = vcmp.eq.f32.partialorder %v341, 0.0
          %v352 = vand.u32 %v341, 2147483648
          %v353 = vsel %vm351, %v352, %v350
          %v354 = vmul.f32 %v318, 0.87758255
          %v355 = vmul.f32 %v353, 0.47942555
          %v356 = vsub.f32 %v354, %v355
          %vm357 = vcmp.gt.f32.partialorder %v318, -0.87758255
          %v358 = vsub.f32 %v318, 0.23971277
          %v359 = vsel %vm357, %v356, %v358
          %v360 = vsub.f32 %v359, %v318
          %v361 = vsel %vm327, %v360, 0.0
          %v362 = vadd.f32 %v318, %v361
          %v363 = vmul.f32 %v362, 30.0
          %364 = vst [vmem:[%s264] sm:$0xff] %v363
        $region52: #{tpu_custom_call.1} parent=39 // pred_fallthru
          _
        %s365 = sand.u32 %s154, 1
        %s366 = scalar_lea.sflag [#allocation6], %s365
        %s367 = sand.u32 %s154, 1
        %s368 = smul.addr %s367, 8
        %s369 = scalar_lea.vmem [#allocation7], %s368
        // Predicated region
        $region53: #{tpu_custom_call.1} parent=39 // pred_check
          %p370 = pneg %p164
        $region54: #{tpu_custom_call.1} parent=39 // pred_check_branch
          %372 = sbr.rel (%p370) target = $region56
        $region55: #{tpu_custom_call.1} parent=39 // pred_region
          %374 = vsyncadd %s366, 0
          %s375 = smul.addr %s31, 8
          %s376 = scalar_lea.hbm %s6, %s375
          %s378 = sshll.u32 %s369, 4
          %s379 = int_to_ptr.vmem [resolvable:$true] %s378
          %s380 = sshll.u32 %s376, 4
          %s381 = int_to_ptr.hbm [resolvable:$true] %s380
          %383 = dma.vmem_to_hbm [thread:$0]  %s379, 128, %s381, %s366
        $region56: #{tpu_custom_call.1} parent=39 // pred_fallthru
          _
      $region40: #{tpu_custom_call.1} parent=5 // pred_fallthru
        _
      %p384 = scmp.le.s32.totalorder 2, %s26
      // Predicated region
      $region57: #{tpu_custom_call.1} parent=5 // pred_check
        %p385 = pneg %p384
      $region58: #{tpu_custom_call.1} parent=5 // pred_check_branch
        %387 = sbr.rel (%p385) target = $region60
      $region59: #{tpu_custom_call.1} parent=5 // pred_region
        %s388 = ssub.s32 %s26, 2
        // Predicated region
        $region61: #{tpu_custom_call.1} parent=59 // pred_check
          %p389 = pneg %p170
        $region62: #{tpu_custom_call.1} parent=59 // pred_check_branch
          %391 = sbr.rel (%p389) target = $region64
        $region63: #{tpu_custom_call.1} parent=59 // pred_region
          %s392 = sand.u32 %s155, 1
          %s393 = scalar_lea.sflag [#allocation6], %s392
          %s394 = sand.u32 %s155, 1
          %s395 = smul.addr %s394, 8
          %s396 = scalar_lea.vmem [#allocation7], %s395
          %398 = dma.done %s393, 128
        $region64: #{tpu_custom_call.1} parent=59 // pred_fallthru
          _
      $region60: #{tpu_custom_call.1} parent=5 // pred_fallthru
        _
    $region6: #{tpu_custom_call.1} parent=1 // loop_footer
      %s30 = sadd.s32 1, %s26
    $region7: #{tpu_custom_call.1} parent=1 // loop_footer_branch
      %25 = sbr.rel target = $region3
    $region8: #{tpu_custom_call.1} parent=1 // loop_exit
      _
    %399 = vsyncpa [#allocation5], 1
    %s400 = scalar_lea.sflag [#allocation5], 1
    %401 = vsyncpa %s400, 1
    %402 = vsyncpa [#allocation6], 1
    %s403 = scalar_lea.sflag [#allocation6], 1
    %404 = vsyncpa %s403, 1

</llo_original>
